<compile_context>
chip_gen: v6e
topology: v6e:2x2x1
jax: 0.10.0
libtpu: 0.0.40
codegen_flags: <defaults>
</compile_context>

<pallas_src>
import jax
import jax.numpy as jnp
from jax.experimental import pallas as pl
from jax.experimental.pallas import tpu as pltpu


# ---------------------------------------------------------------------------
# Zero-copy path: aliased output, no data movement.
# ---------------------------------------------------------------------------
def _alias_identity_kernel(x_ref, o_ref):
    del x_ref  # unused: the output buffer *is* the input buffer
    # Fake read+write dependency so the aliased output is considered produced.
    pltpu.touch(o_ref)


def _zero_copy_identity(x):
    return pl.pallas_call(
        _alias_identity_kernel,
        out_shape=jax.ShapeDtypeStruct(x.shape, x.dtype),
        in_specs=[pl.BlockSpec(memory_space=pl.ANY)],
        out_specs=pl.BlockSpec(memory_space=pl.ANY),
        input_output_aliases={0: 0},
        cost_estimate=pl.CostEstimate(flops=0, transcendentals=0, bytes_accessed=0),
    )(x)


# ---------------------------------------------------------------------------
# Materializing path: one direct HBM->HBM DMA (fresh output buffer).
# ---------------------------------------------------------------------------
def _dma_copy_kernel(x_hbm, o_hbm):
    def body(sem):
        cp = pltpu.make_async_copy(x_hbm, o_hbm, sem)
        cp.start()
        cp.wait()

    pl.run_scoped(body, pltpu.SemaphoreType.DMA(()))


def _dma_copy_identity(x):
    nbytes = x.size * jnp.dtype(x.dtype).itemsize
    return pl.pallas_call(
        _dma_copy_kernel,
        out_shape=jax.ShapeDtypeStruct(x.shape, x.dtype),
        in_specs=[pl.BlockSpec(memory_space=pl.ANY)],
        out_specs=pl.BlockSpec(memory_space=pl.ANY),
        cost_estimate=pl.CostEstimate(
            flops=0, transcendentals=0, bytes_accessed=2 * nbytes
        ),
    )(x)


_ALIAS_PATH_OK = True  # flipped off once if the zero-copy shell cannot lower


def dummy_layer_norm(x, *, materialize=False):
    """Forward pass of DummyLayerNorm: returns the input unchanged."""
    global _ALIAS_PATH_OK
    if x.size == 0:
        return x
    if not materialize and _ALIAS_PATH_OK:
        try:
            return _zero_copy_identity(x)
        except Exception:
            # Alias shell unavailable in this build: do a real (single-DMA) copy.
            _ALIAS_PATH_OK = False
    return _dma_copy_identity(x)


class DummyLayerNorm:
    """Pallas-backed equivalent of the PyTorch DummyLayerNorm placeholder."""

    def __init__(self, normalized_shape, eps=1e-05):
        del normalized_shape, eps  # unused, matching the PyTorch placeholder

    def __call__(self, x):
        return dummy_layer_norm(x)


if __name__ == "__main__":
    key = jax.random.PRNGKey(0)
    # GPT-style activation: (batch=2, seq=8, hidden=32)
    x = jax.random.normal(key, (2, 8, 32), dtype=jnp.float32)

    layer = DummyLayerNorm(normalized_shape=32)
    y = layer(x)
    jax.block_until_ready(y)
    assert y.shape == x.shape and y.dtype == x.dtype
    assert jnp.array_equal(y, x), "DummyLayerNorm must return input unchanged"

    # Ragged / non-128-aligned total size: no pad+slice passes needed anymore.
    x2 = jax.random.normal(jax.random.PRNGKey(1), (4, 33, 7), dtype=jnp.float32)
    y2 = layer(x2)
    jax.block_until_ready(y2)
    assert jnp.array_equal(y2, x2), "ragged-shape identity mismatch"

    # Materializing path: single HBM->HBM DMA copy into a fresh buffer.
    y3 = dummy_layer_norm(x, materialize=True)
    jax.block_until_ready(y3)
    assert jnp.array_equal(y3, x), "materializing copy mismatch"

    print("KERNEL_OK")
</pallas_src>

<mosaic_0001>
module attributes {stable_mosaic.version = 11 : i64} {
  func.func @_alias_identity_kernel(%arg0: memref<2x8x32xf32, #tpu.memory_space<any>>, %arg1: memref<2x8x32xf32, #tpu.memory_space<any>>) attributes {dimension_semantics = [], scalar_prefetch = 0 : i64, scratch_operands = 0 : i64, tpu.core_type = #tpu.core_type<tc>} {
    return
  }
}

module attributes {stable_mosaic.version = 11 : i64} {
  func.func @_dma_copy_kernel(%arg0: memref<2x8x32xf32, #tpu.memory_space<any>>, %arg1: memref<2x8x32xf32, #tpu.memory_space<any>>) attributes {dimension_semantics = [], scalar_prefetch = 0 : i64, scratch_operands = 0 : i64, tpu.core_type = #tpu.core_type<tc>} {
    "tpu.region"() ({
      %0 = tpu.sem_alloc : memref<!tpu.dma_semaphore, #tpu.memory_space<semaphore_mem>>
      tpu.enqueue_dma source(%arg0 : memref<2x8x32xf32, #tpu.memory_space<any>>) target(%arg1 : memref<2x8x32xf32, #tpu.memory_space<any>>) target_semaphore(%0 : memref<!tpu.dma_semaphore, #tpu.memory_space<semaphore_mem>>)
      tpu.wait_dma2 semaphore(%0 : memref<!tpu.dma_semaphore, #tpu.memory_space<semaphore_mem>>) src(%arg0 : memref<2x8x32xf32, #tpu.memory_space<any>>) dst(%arg1 : memref<2x8x32xf32, #tpu.memory_space<any>>)
      tpu.yield
    }) : () -> ()
    return
  }
}

</mosaic_0001>

<llo_original>
// kernel: tpu_custom_call.1
$region0: #{tpu_custom_call.1}
  #allocation0 [shape = 'u32[]', space=smem, size = 0x4, offset = 0x4, fixed_abs, tag = 'smem constant byte address 0x4 - core index']
  #allocation1 [shape = 'u32[144,128]{1,0:T(1,128)}', space=vmem, size = 0x12000, scoped, tag = 'internal scratch']
  %s0 = inlined_call_operand.hbm [shape: f32[2,8,32], index: 0, kind: input, shape index: {}, may-alias: {0,1}]
  %s1 = inlined_call_operand.hbm [shape: f32[2,8,32], index: 1, kind: output, shape index: {}, may-alias: {0,1}]
  %s2 = sld [smem:[#allocation0]]
  $region2: #{tpu_custom_call.1} parent=0
    _
  %s4 = ssub.s32 1, %s2
  %s5 = scalar_select 0, %s4, %s2

// kernel: tpu_custom_call.1
$region0: #{tpu_custom_call.1}
  #allocation0 [shape = 'u32[]', space=smem, size = 0x4, offset = 0x4, fixed_abs, tag = 'smem constant byte address 0x4 - core index']
  #allocation1 [shape = 'u32[144,128]{1,0:T(1,128)}', space=vmem, size = 0x12000, scoped, tag = 'internal scratch']
  #allocation3 [shape = 's32[]', space=sflag, size = 0x4, offset = 0, fixed_abs, tag = 'sflag constant byte address 0x0 - dummy sync flag']
  #allocation4 [shape = 'u32[0]{0}', space=smem, size = 0, offset = 0, fixed_abs, tag = 'smem constant byte address 0x0 - null']
  %s0 = inlined_call_operand.hbm [shape: f32[2,8,32], index: 0, kind: input, shape index: {}]
  %s1 = inlined_call_operand.hbm [shape: f32[2,8,32], index: 1, kind: output, shape index: {}]
  %s2 = sld [smem:[#allocation0]]
  $region3: #{tpu_custom_call.1} parent=0
    _
  %s4 = ssub.s32 1, %s2
  %s5 = scalar_select 0, %s4, %s2
  $region2: #{tpu_custom_call.1} parent=0
    #allocation2 [shape = 's32[1]{0}', space=sflag, size = 0x4, scoped, tag = 'scoped memory for tpu_custom_call.1']
    %s7 = sshll.u32 1, 14
    %s8 = sxor.u32 4294967295, %s7
    %12 = dma.general %s0, 256, %s1, [#allocation2], 131072, [#allocation4], 0, 0
    %s13 = smul.u32 2, 8
    %s14 = smul.u32 %s13, 1
    %s15 = sshll.u32 %s14, 4
    %16 = dma.done [#allocation2], %s15

</llo_original>
